<compile_context>
chip_gen: v7x
topology: tpu7x:2x2x1
jax: 0.10.0
libtpu: 0.0.40
codegen_flags: <defaults>
</compile_context>

<pallas_src>
import jax
import jax.numpy as jnp
from jax.experimental import pallas as pl
from jax.experimental.pallas import tpu as pltpu


def attention_kernel(x_ref, w_ref, ctx_ref, attn_ref):
    # x_ref:    (TB, S, H) VMEM tile of batch rows
    # w_ref:    (1, H)     lane-dense attention weight (PyTorch Linear layout)
    # ctx_ref:  (TB, H)    context output tile
    # attn_ref: (TB, S)    lane-dense attention-weight output tile
    w = w_ref[...].astype(jnp.float32)                               # (1, H)

    # scores: VPU multiply + lane (H) reduction, kept with S on sublanes as
    # (TB, S, 1) — avoids a sublane<->lane relayout before the context pass.
    scores = jnp.sum(x_ref[...].astype(jnp.float32) * w[None, :, :],
                     axis=-1, keepdims=True)                         # (TB, S, 1)

    # Numerically-stable softmax over the sequence axis (axis=1, sublanes).
    m = jnp.max(scores, axis=1, keepdims=True)                       # (TB, 1, 1)
    e = jnp.exp(scores - m)                                          # (TB, S, 1)
    denom = jnp.sum(e, axis=1, keepdims=True)                        # (TB, 1, 1)
    inv = pl.reciprocal(denom, approx=True)                          # EUP slot (free here)
    inv = inv * (2.0 - denom * inv)                                  # Newton step -> ~f32 exact
    weights = e * inv                                                # (TB, S, 1)

    # context = sum over S of weights * lstm_out. Re-read x from VMEM (cheap
    # vld) rather than keeping a full f32 copy of the tile alive; weights
    # broadcast over the lane (H) axis.
    ctx = jnp.sum(weights * x_ref[...].astype(jnp.float32), axis=1)  # (TB, H)
    ctx_ref[...] = ctx.astype(ctx_ref.dtype)

    # Single relayout at the end: (TB, S, 1) sublane-major -> lane-dense (TB, S).
    attn_ref[...] = weights[:, :, 0].astype(attn_ref.dtype)


def _vmem_limit_bytes():
    """Explicit VMEM budget for the compiler: ~3/4 of physical capacity
    (96 MiB on v5e/v6e, 48 MiB per TensorCore on v7x). Falls back to a
    conservative 48 MiB if the hardware query is unavailable."""
    cap = None
    try:
        info = pltpu.get_tpu_info()
        cap = getattr(info, "vmem_capacity_bytes", None)
    except Exception:  # pragma: no cover - query unavailable (e.g. interpret)
        cap = None
    if not cap:
        cap = 64 * 1024 * 1024  # conservative: fits every generation
    return (int(cap) * 3) // 4


def _choose_block_b(B, S, H, dtype, *, vmem_limit_bytes, target_steps=8):
    """Largest batch tile whose pipeline footprint fits the VMEM budget, but
    never fewer than ~target_steps grid steps (so double-buffering has work to
    overlap, and both TensorCores stay busy on v7x). Rounded to a multiple of
    8 (or the full batch) for the (8,128) output-tile constraint."""
    itemsize = jnp.dtype(dtype).itemsize
    # Per batch-row footprint of the software pipeline:
    #   2x double-buffered input rows             : 2 * S * H * itemsize
    #   softmax temps in (S, 1) sublane form (f32): ~2 * S * 128 * 4
    #   2x double-buffered ctx / attn output rows : 2 * (H + S) * itemsize
    per_row = 2 * S * H * itemsize + 2 * S * 128 * 4 + 2 * (H + S) * itemsize
    headroom = 4 * 1024 * 1024
    budget = max(vmem_limit_bytes - headroom, per_row)
    fit = max(1, budget // per_row)
    pipelined = max(1, -(-B // target_steps))   # ceil(B / target_steps)
    block_b = min(fit, pipelined)
    if block_b >= B:
        return B
    block_b = max(8, (block_b // 8) * 8)
    return min(block_b, B)


def attention_forward(lstm_out, attn_weight, *, block_b=None):
    """lstm_out: (B, S, H). attn_weight: (1, H) (PyTorch Linear weight layout).
    Returns (context (B, H), attn_weights (B, S, 1))."""
    B, S, H = lstm_out.shape
    w = attn_weight.reshape(1, H)          # keep lane-dense (1, H); no transpose

    vmem_limit = _vmem_limit_bytes()
    if block_b is None:
        block_b = _choose_block_b(B, S, H, lstm_out.dtype,
                                  vmem_limit_bytes=vmem_limit)
    grid = (pl.cdiv(B, block_b),)

    grid_spec = pltpu.PrefetchScalarGridSpec(
        num_scalar_prefetch=0,
        grid=grid,
        in_specs=[
            pl.BlockSpec((block_b, S, H), lambda b: (b, 0, 0)),  # batch tile
            pl.BlockSpec((1, H), lambda b: (0, 0)),              # shared weight
        ],
        out_specs=[
            pl.BlockSpec((block_b, H), lambda b: (b, 0)),        # context tile
            pl.BlockSpec((block_b, S), lambda b: (b, 0)),        # lane-dense attn
        ],
    )

    context, attn_flat = pl.pallas_call(
        attention_kernel,
        out_shape=(
            jax.ShapeDtypeStruct((B, H), lstm_out.dtype),
            jax.ShapeDtypeStruct((B, S), lstm_out.dtype),
        ),
        grid_spec=grid_spec,
        compiler_params=pltpu.CompilerParams(
            # Batch axis is independent; on v7x switch to pltpu.CORE_PARALLEL
            # if a profile shows one TensorCore idle.
            dimension_semantics=("parallel",),
            vmem_limit_bytes=vmem_limit,
        ),
    )(lstm_out, w)

    # PyTorch returns attn_weights with a trailing singleton dim; reshape in
    # the wrapper so the kernel's store stays lane-dense.
    return context, attn_flat.reshape(B, S, 1)


def attention_ref(lstm_out, attn_weight):
    # Pure-JAX reference matching PyTorch semantics.
    scores = jnp.einsum("bsh,oh->bso", lstm_out, attn_weight)   # (B, S, 1)
    attn_w = jax.nn.softmax(scores, axis=1)
    context = jnp.sum(attn_w * lstm_out, axis=1)                # (B, H)
    return context, attn_w


if __name__ == "__main__":
    key = jax.random.PRNGKey(0)
    k_x, k_w = jax.random.split(key)

    B, S, H = 2, 8, 32
    lstm_out = jax.random.normal(k_x, (B, S, H), dtype=jnp.float32)
    # Deterministic init of nn.Linear(hidden_dim, 1, bias=False).weight, shape (1, H)
    attn_weight = jax.random.normal(k_w, (1, H), dtype=jnp.float32) * (1.0 / jnp.sqrt(H))

    context, attn_w = attention_forward(lstm_out, attn_weight)
    context, attn_w = jax.block_until_ready((context, attn_w))

    ctx_ref, attn_ref_out = attention_ref(lstm_out, attn_weight)
    assert context.shape == (B, H)
    assert attn_w.shape == (B, S, 1)
    assert jnp.allclose(context, ctx_ref, atol=2e-5, rtol=2e-5)
    assert jnp.allclose(attn_w, attn_ref_out, atol=2e-5, rtol=2e-5)

    print("KERNEL_OK")
</pallas_src>

<mosaic_0001>
module attributes {stable_mosaic.version = 11 : i64} {
  func.func @attention_kernel(%arg0: i32, %arg1: memref<2x8x32xf32, #tpu.memory_space<vmem>>, %arg2: memref<1x32xf32, #tpu.memory_space<vmem>>, %arg3: memref<2x32xf32, #tpu.memory_space<vmem>>, %arg4: memref<2x8xf32, #tpu.memory_space<vmem>>) attributes {dimension_semantics = [#tpu.dimension_semantics<parallel>], iteration_bounds = array<i64: 1>, scalar_prefetch = 0 : i64, scratch_operands = 0 : i64, tpu.core_type = #tpu.core_type<tc>, window_params = [{transform_indices = @transform_0, window_bounds = array<i64: 2, 8, 32>}, {pipeline_mode = #tpu.pipeline_mode<synchronous>, transform_indices = @transform_1, window_bounds = array<i64: 1, 32>}, {transform_indices = @transform_2, window_bounds = array<i64: 2, 32>}, {transform_indices = @transform_3, window_bounds = array<i64: 2, 8>}]} {
    %c0 = arith.constant 0 : index
    %c0_0 = arith.constant 0 : index
    %0 = vector.load %arg2[%c0, %c0_0] : memref<1x32xf32, #tpu.memory_space<vmem>>, vector<1x32xf32>
    %c0_1 = arith.constant 0 : index
    %c0_2 = arith.constant 0 : index
    %c0_3 = arith.constant 0 : index
    %1 = vector.load %arg1[%c0_1, %c0_2, %c0_3] : memref<2x8x32xf32, #tpu.memory_space<vmem>>, vector<2x8x32xf32>
    %2 = vector.shape_cast %0 : vector<1x32xf32> to vector<1x1x32xf32>
    %3 = vector.broadcast %2 : vector<1x1x32xf32> to vector<2x8x32xf32>
    %4 = arith.mulf %1, %3 : vector<2x8x32xf32>
    %cst = arith.constant dense<0.000000e+00> : vector<2x8xf32>
    %5 = vector.multi_reduction <add>, %4, %cst [2] : vector<2x8x32xf32> to vector<2x8xf32>
    %6 = vector.shape_cast %5 : vector<2x8xf32> to vector<2x8x1xf32>
    %cst_4 = arith.constant dense<0xFF800000> : vector<2x1xf32>
    %7 = vector.multi_reduction <maximumf>, %6, %cst_4 [1] : vector<2x8x1xf32> to vector<2x1xf32>
    %8 = vector.shape_cast %7 : vector<2x1xf32> to vector<2x1x1xf32>
    %9 = vector.broadcast %8 : vector<2x1x1xf32> to vector<2x8x1xf32>
    %10 = arith.subf %6, %9 : vector<2x8x1xf32>
    %11 = math.exp %10 : vector<2x8x1xf32>
    %cst_5 = arith.constant dense<0.000000e+00> : vector<2x1xf32>
    %12 = vector.multi_reduction <add>, %11, %cst_5 [1] : vector<2x8x1xf32> to vector<2x1xf32>
    %13 = vector.shape_cast %12 : vector<2x1xf32> to vector<2x1x1xf32>
    %14 = tpu.reciprocal %13 {approx = true} : vector<2x1x1xf32> -> vector<2x1x1xf32>
    %15 = arith.mulf %13, %14 : vector<2x1x1xf32>
    %cst_6 = arith.constant 2.000000e+00 : f32
    %16 = vector.broadcast %cst_6 : f32 to vector<2x1x1xf32>
    %17 = arith.subf %16, %15 : vector<2x1x1xf32>
    %18 = arith.mulf %14, %17 : vector<2x1x1xf32>
    %19 = vector.broadcast %18 : vector<2x1x1xf32> to vector<2x8x1xf32>
    %20 = arith.mulf %11, %19 : vector<2x8x1xf32>
    %c0_7 = arith.constant 0 : index
    %c0_8 = arith.constant 0 : index
    %c0_9 = arith.constant 0 : index
    %21 = vector.load %arg1[%c0_7, %c0_8, %c0_9] : memref<2x8x32xf32, #tpu.memory_space<vmem>>, vector<2x8x32xf32>
    %22 = vector.broadcast %20 : vector<2x8x1xf32> to vector<2x8x32xf32>
    %23 = arith.mulf %22, %21 : vector<2x8x32xf32>
    %cst_10 = arith.constant dense<0.000000e+00> : vector<2x32xf32>
    %24 = vector.multi_reduction <add>, %23, %cst_10 [1] : vector<2x8x32xf32> to vector<2x32xf32>
    %c0_11 = arith.constant 0 : index
    %c0_12 = arith.constant 0 : index
    %25 = vector.load %arg3[%c0_11, %c0_12] : memref<2x32xf32, #tpu.memory_space<vmem>>, vector<2x32xf32>
    tpu.vector_store %arg3[%c0_11, %c0_12], %24 {strides = array<i32>} : memref<2x32xf32, #tpu.memory_space<vmem>>, vector<2x32xf32>,
    %26 = vector.shape_cast %20 : vector<2x8x1xf32> to vector<2x8xf32>
    %c0_13 = arith.constant 0 : index
    %c0_14 = arith.constant 0 : index
    %27 = vector.load %arg4[%c0_13, %c0_14] : memref<2x8xf32, #tpu.memory_space<vmem>>, vector<2x8xf32>
    tpu.vector_store %arg4[%c0_13, %c0_14], %26 {strides = array<i32>} : memref<2x8xf32, #tpu.memory_space<vmem>>, vector<2x8xf32>,
    return
  }
  func.func @transform_0(%arg0: i32) -> (i32, i32, i32) {
    %c0_i32 = arith.constant 0 : i32
    %c0_i32_0 = arith.constant 0 : i32
    %c0_i32_1 = arith.constant 0 : i32
    return %arg0, %c0_i32, %c0_i32_0 : i32, i32, i32
  }
  func.func @transform_1(%arg0: i32) -> (i32, i32) {
    %c0_i32 = arith.constant 0 : i32
    %c0_i32_0 = arith.constant 0 : i32
    %c0_i32_1 = arith.constant 0 : i32
    return %c0_i32, %c0_i32_0 : i32, i32
  }
  func.func @transform_2(%arg0: i32) -> (i32, i32) {
    %c0_i32 = arith.constant 0 : i32
    %c0_i32_0 = arith.constant 0 : i32
    return %arg0, %c0_i32 : i32, i32
  }
  func.func @transform_3(%arg0: i32) -> (i32, i32) {
    %c0_i32 = arith.constant 0 : i32
    %c0_i32_0 = arith.constant 0 : i32
    return %arg0, %c0_i32 : i32, i32
  }
}

</mosaic_0001>

<llo_original>
// kernel: tpu_custom_call.1
$region0: #{tpu_custom_call.1}
  #allocation0 [shape = 'u32[]', space=smem, size = 0x4, offset = 0x4, fixed_abs, tag = 'smem constant byte address 0x4 - core index']
  #allocation1 [shape = 'u32[144,128]{1,0:T(1,128)}', space=vmem, size = 0x12000, scoped, tag = 'internal scratch']
  %s0 = inlined_call_operand.hbm [shape: f32[2,8,32], index: 0, kind: input, shape index: {}]
  %s1 = inlined_call_operand.vmem [shape: f32[1,32], index: 1, kind: input, shape index: {}]
  %s2 = inlined_call_operand.hbm [shape: f32[2,32], index: 2, kind: output, shape index: {0}]
  %s3 = inlined_call_operand.hbm [shape: f32[2,8], index: 3, kind: output, shape index: {1}]
  %4 = xla_tuple %s2, %s3
  %s5 = sld [smem:[#allocation0]]
  $region30: #{tpu_custom_call.1} parent=0
    _
  %s7 = ssub.s32 1, %s5
  %s8 = scalar_select 0, %s7, %s5
  $region1: #{tpu_custom_call.1} parent=0
    #allocation2 [shape = 'u8[8192]{0}', space=vmem, size = 0x2000, scoped, tag = 'input window, operand 0, single buffered']
    #allocation3 [shape = 's32[1]{0}', space=sflag, size = 0x4, scoped, tag = 'scoped memory for tpu_custom_call.1']
    #allocation4 [shape = 's32[1]{0}', space=sflag, size = 0x4, scoped, tag = 'scoped memory for tpu_custom_call.1']
    #allocation5 [shape = 'u8[1024]{0}', space=vmem, size = 0x400, scoped, tag = 'output window, operand 0, single buffered']
    #allocation6 [shape = 'u8[1024]{0}', space=vmem, size = 0x400, scoped, tag = 'output window, operand 1, single buffered']
    #allocation7 [shape = 's32[1]{0}', space=sflag, size = 0x4, scoped, tag = 'scoped memory for tpu_custom_call.1']
    %9 = vsyncpa [#allocation3], 0
    %10 = vsyncpa [#allocation4], 0
    %11 = vsyncpa [#allocation7], 0
    // Predicated region
    $region2: #{tpu_custom_call.1} parent=1 // pred_check
      _
    $region3: #{tpu_custom_call.1} parent=1 // pred_check_branch
      %13 = sbr.rel (0) target = $region5
    $region4: #{tpu_custom_call.1} parent=1 // pred_region
      %s15 = ssub.s32 256, 256
      %16 = vsyncadd [#allocation3], %s15
      %s17 = sshll.u32 [#allocation2], 4
      %s18 = int_to_ptr.vmem [resolvable:$true] %s17
      %23 = dma.hbm_to_vmem [thread:$0]  %s0, 256, %s18, [#allocation3], 128, 128, 8
    $region5: #{tpu_custom_call.1} parent=1 // pred_fallthru
      _
    // Predicated region
    $region6: #{tpu_custom_call.1} parent=1 // pred_check
      _
    $region7: #{tpu_custom_call.1} parent=1 // pred_check_branch
      %25 = sbr.rel (0) target = $region9
    $region8: #{tpu_custom_call.1} parent=1 // pred_region
      _
    $region9: #{tpu_custom_call.1} parent=1 // pred_fallthru
      _
    // Predicated region
    $region10: #{tpu_custom_call.1} parent=1 // pred_check
      _
    $region11: #{tpu_custom_call.1} parent=1 // pred_check_branch
      %27 = sbr.rel (0) target = $region13
    $region12: #{tpu_custom_call.1} parent=1 // pred_region
      %28 = dma.done [#allocation3], 256
    $region13: #{tpu_custom_call.1} parent=1 // pred_fallthru
      _
    %v29 = vld [vmem:[%s1] sm:$0x1]
    %v30 = vld [vmem:[#allocation2] sm:$0xff]
    %v31 = vld [vmem:[#allocation2 + $0x8] sm:$0xff]
    %v33 = vlaneseq
    %v34 = vshrl.u32 %v33, 7
    %v35 = vsub.s32 0, %v34
    %v36 = vrot.slane %v29, %v35
    %v38 = vmul.f32 %v30, %v36
    %v39 = vmul.f32 %v31, %v36
    %vm40 = vcmask 261120
    %v41 = vsel %vm40, %v38, 0.0
    %42 = vadd.xlane.f32.xlu0 %v41
    %v43 = vpop.xlane.xlu0 %42
    %v44 = vsel %vm40, %v39, 0.0
    %45 = vadd.xlane.f32.xlu0 %v44
    %v46 = vpop.xlane.xlu0 %45
    %v47 = vrot.slane %v43, 4
    %v48 = vmax.f32 %v43, %v47
    %v49 = vrot.slane %v48, 2
    %v50 = vmax.f32 %v48, %v49
    %v51 = vrot.slane %v50, 1
    %v52 = vmax.f32 %v50, %v51
    %v53 = vrot.slane %v46, 4
    %v54 = vmax.f32 %v46, %v53
    %v55 = vrot.slane %v54, 2
    %v56 = vmax.f32 %v54, %v55
    %v57 = vrot.slane %v56, 1
    %v58 = vmax.f32 %v56, %v57
    %v59 = vsub.f32 %v43, %v52
    %v60 = vsub.f32 %v46, %v58
    %v61 = vmul.f32 %v59, 1.442695
    %v62 = vpow.pop %v61
    %v63 = vmul.f32 %v60, 1.442695
    %v64 = vpow.pop %v63
    %v65 = vrot.slane %v62, 4
    %v66 = vadd.f32 %v62, %v65
    %v67 = vrot.slane %v66, 2
    %v68 = vadd.f32 %v66, %v67
    %v69 = vrot.slane %v68, 1
    %v70 = vadd.f32 %v68, %v69
    %v71 = vrot.slane %v64, 4
    %v72 = vadd.f32 %v64, %v71
    %v73 = vrot.slane %v72, 2
    %v74 = vadd.f32 %v72, %v73
    %v75 = vrot.slane %v74, 1
    %v76 = vadd.f32 %v74, %v75
    %v77 = vrcp.pop %v70
    %v78 = vrcp.pop %v76
    %v79 = vmul.f32 %v70, %v77
    %v80 = vmul.f32 %v76, %v78
    %v81 = vsub.f32 2.0, %v79
    %v82 = vsub.f32 2.0, %v80
    %v83 = vmul.f32 %v77, %v81
    %v84 = vmul.f32 %v78, %v82
    %v85 = vmul.f32 %v62, %v83
    %v86 = vmul.f32 %v64, %v84
    %v87 = vmul.f32 %v85, %v30
    %v88 = vmul.f32 %v86, %v31
    %v89 = vsel %vm40, %v87, 0.0
    %v90 = vrot.slane %v89, 4
    %v91 = vadd.f32 %v89, %v90
    %v92 = vrot.slane %v91, 2
    %v93 = vadd.f32 %v91, %v92
    %v94 = vrot.slane %v93, 1
    %v95 = vadd.f32 %v93, %v94
    %v96 = vsel %vm40, %v88, 0.0
    %v97 = vrot.slane %v96, 4
    %v98 = vadd.f32 %v96, %v97
    %v99 = vrot.slane %v98, 2
    %v100 = vadd.f32 %v98, %v99
    %v101 = vrot.slane %v100, 1
    %v102 = vadd.f32 %v100, %v101
    %vm105 = vcmask 1041409
    %v106 = vsel %vm105, %v102, %v95
    %vm108 = vcmask 254976
    %109 = vst.msk [vmem:[#allocation5] sm:$0x3] %vm108, %v106
    %v112 = vlaneseq
    %v113 = vand.u32 %v112, 127
    %v114 = vlaneseq
    %v115 = vshrl.u32 %v114, 7
    %v116 = vsub.s32 %v113, %v115
    %v117 = vrot.slane %v85, %v116
    %v118 = vlaneseq
    %v119 = vshrl.u32 %v118, 7
    %v120 = vsub.s32 %v113, %v119
    %v121 = vrot.slane %v86, %v120
    %v122 = vsel %vm105, %v121, %v117
    %vm124 = vcmask 58368
    %125 = vst.msk [vmem:[#allocation6] sm:$0x3] %vm124, %v122
    // Predicated region
    $region14: #{tpu_custom_call.1} parent=1 // pred_check
      _
    $region15: #{tpu_custom_call.1} parent=1 // pred_check_branch
      %127 = sbr.rel (0) target = $region17
    $region16: #{tpu_custom_call.1} parent=1 // pred_region
      %s129 = ssub.s32 32, 32
      %130 = vsyncadd [#allocation4], %s129
      %s132 = sshll.u32 [#allocation5], 4
      %s133 = int_to_ptr.vmem [resolvable:$true] %s132
      %135 = dma.vmem_to_hbm [thread:$0]  %s133, 32, %s2, [#allocation4]
    $region17: #{tpu_custom_call.1} parent=1 // pred_fallthru
      _
    // Predicated region
    $region18: #{tpu_custom_call.1} parent=1 // pred_check
      _
    $region19: #{tpu_custom_call.1} parent=1 // pred_check_branch
      %137 = sbr.rel (0) target = $region21
    $region20: #{tpu_custom_call.1} parent=1 // pred_region
      %s139 = ssub.s32 32, 32
      %140 = vsyncadd [#allocation7], %s139
      %s142 = sshll.u32 [#allocation6], 4
      %s143 = int_to_ptr.vmem [resolvable:$true] %s142
      %145 = dma.vmem_to_hbm [thread:$0]  %s143, 32, %s3, [#allocation7]
    $region21: #{tpu_custom_call.1} parent=1 // pred_fallthru
      _
    // Predicated region
    $region22: #{tpu_custom_call.1} parent=1 // pred_check
      _
    $region23: #{tpu_custom_call.1} parent=1 // pred_check_branch
      %147 = sbr.rel (0) target = $region25
    $region24: #{tpu_custom_call.1} parent=1 // pred_region
      %148 = dma.done [#allocation4], 32
    $region25: #{tpu_custom_call.1} parent=1 // pred_fallthru
      _
    // Predicated region
    $region26: #{tpu_custom_call.1} parent=1 // pred_check
      _
    $region27: #{tpu_custom_call.1} parent=1 // pred_check_branch
      %150 = sbr.rel (0) target = $region29
    $region28: #{tpu_custom_call.1} parent=1 // pred_region
      %151 = dma.done [#allocation7], 32
    $region29: #{tpu_custom_call.1} parent=1 // pred_fallthru
      _
    %152 = vsyncpa [#allocation3], 1
    %153 = vsyncpa [#allocation4], 1
    %154 = vsyncpa [#allocation7], 1

</llo_original>
